<compile_context>
chip_gen: v5e
topology: v5e:2x2
jax: 0.10.0
libtpu: 0.0.40
codegen_flags: <defaults>
</compile_context>

<pallas_src>
import jax
import jax.numpy as jnp
from jax.experimental import pallas as pl
from jax.experimental.pallas import tpu as pltpu

LANE = 128


def _round_up(x, m):
    return (x + m - 1) // m * m


def _fused_decoder_kernel(tok_ref,          # SMEM (T,) int32   (scalar prefetch)
                          emb_ref,          # VMEM (1, 1, Hp)   embedding row of token[t]
                          h0_ref,           # VMEM (1, Hp)      initial hidden state
                          w_gates_ref,      # VMEM (2*Hp, 3*Hp) [W_ih ; W_hh] in x@W layout
                          b_gates_ref,      # VMEM (2, 3*Hp)    [b_ih ; b_hh]
                          w_out_ref,        # VMEM (Hp, Op)     output projection (x@W layout)
                          b_out_ref,        # VMEM (1, Op)
                          logp_ref,         # VMEM (1, 1, Op)   out: log-probs for step t
                          h_ref):           # VMEM (1, Hp)      out: hidden carry / final
    t = pl.program_id(0)
    Hp = h_ref.shape[1]

    # Step 0: seed the VMEM-resident hidden-state carry from the kernel input.
    @pl.when(t == 0)
    def _():
        h_ref[...] = h0_ref[...]

    # F.relu(embedding(token))
    x = jnp.maximum(emb_ref[0], 0.0)                       # (1, Hp)
    h = h_ref[...]                                         # (1, Hp)

    # Block-diagonal LHS: row 0 -> x @ W_ih, row 1 -> h @ W_hh, single MXU matmul.
    zeros = jnp.zeros_like(x)
    lhs = jnp.concatenate(
        [jnp.concatenate([x, zeros], axis=1),
         jnp.concatenate([zeros, h], axis=1)], axis=0)     # (2, 2*Hp)
    g = jnp.dot(lhs, w_gates_ref[...],
                preferred_element_type=jnp.float32) + b_gates_ref[...]   # (2, 3*Hp)
    gi = g[0:1, :]
    gh = g[1:2, :]

    # PyTorch GRU gate order [r | z | n]; each gate sits on a full 128-lane span.
    i_r, i_z, i_n = gi[:, 0:Hp], gi[:, Hp:2 * Hp], gi[:, 2 * Hp:3 * Hp]
    h_r, h_z, h_n = gh[:, 0:Hp], gh[:, Hp:2 * Hp], gh[:, 2 * Hp:3 * Hp]

    r = jax.nn.sigmoid(i_r + h_r)
    z = jax.nn.sigmoid(i_z + h_z)
    n = jnp.tanh(i_n + r * h_n)                 # b_hn is inside h_n, matching PyTorch
    h_new = (1.0 - z) * n + z * h
    h_ref[...] = h_new

    # LogSoftmax(Linear(h_new)); padded logit lanes carry a -1e30 bias.
    logits = jnp.dot(h_new, w_out_ref[...],
                     preferred_element_type=jnp.float32) + b_out_ref[...]  # (1, Op)
    m = jnp.max(logits, axis=-1, keepdims=True)
    s = logits - m
    lse = jnp.log(jnp.sum(jnp.exp(s), axis=-1, keepdims=True))
    logp_ref[0] = s - lse


def init_params(key, hidden_size, output_size):
    """PyTorch-layout parameters (uniform(-1/sqrt(H), 1/sqrt(H)) like nn.GRU / nn.Linear)."""
    ks = jax.random.split(key, 7)
    bound = 1.0 / float(hidden_size) ** 0.5
    u = lambda k, shape: jax.random.uniform(k, shape, jnp.float32, -bound, bound)
    return dict(
        embedding=jax.random.normal(ks[0], (output_size, hidden_size), jnp.float32),
        w_ih=u(ks[1], (3 * hidden_size, hidden_size)),   # GRU weight_ih_l0, gates [r|z|n]
        w_hh=u(ks[2], (3 * hidden_size, hidden_size)),   # GRU weight_hh_l0
        b_ih=u(ks[3], (3 * hidden_size,)),
        b_hh=u(ks[4], (3 * hidden_size,)),
        w_out=u(ks[5], (output_size, hidden_size)),      # Linear weight
        b_out=u(ks[6], (output_size,)),
    )


def _pack_params(params, H, O):
    """Pad to 128-lane tiles and transpose into x @ W layouts for the kernel."""
    Hp = _round_up(H, LANE)
    Op = _round_up(O, LANE)
    V = params["embedding"].shape[0]
    f32 = jnp.float32

    emb = jnp.zeros((V, 1, Hp), f32).at[:, 0, :H].set(params["embedding"])

    def pad_w(w):                         # (3H, H) -> (Hp, 3*Hp), gates lane-aligned
        wt = w.T
        out = jnp.zeros((Hp, 3 * Hp), f32)
        for g in range(3):
            out = out.at[:H, g * Hp:g * Hp + H].set(wt[:, g * H:(g + 1) * H])
        return out

    def pad_b(b):                         # (3H,) -> (3*Hp,)
        out = jnp.zeros((3 * Hp,), f32)
        for g in range(3):
            out = out.at[g * Hp:g * Hp + H].set(b[g * H:(g + 1) * H])
        return out

    w_gates = jnp.concatenate([pad_w(params["w_ih"]), pad_w(params["w_hh"])], axis=0)
    b_gates = jnp.stack([pad_b(params["b_ih"]), pad_b(params["b_hh"])], axis=0)
    w_out = jnp.zeros((Hp, Op), f32).at[:H, :O].set(params["w_out"].T)
    b_out = jnp.full((1, Op), -1e30, f32).at[:, :O].set(params["b_out"][None, :])
    return emb, w_gates, b_gates, w_out, b_out, Hp, Op


@jax.jit
def decoder_decode(token_ids, hidden, params):
    """Fused multi-step decode: one pallas_call over all T tokens (teacher forced).

    token_ids : (T,) int32, hidden : (1, 1, H).
    Returns (log_probs (T, O), final hidden (1, 1, H)).
    """
    H = params["w_ih"].shape[1]
    O = params["w_out"].shape[0]
    T = token_ids.shape[0]
    emb, w_gates, b_gates, w_out, b_out, Hp, Op = _pack_params(params, H, O)
    h0 = jnp.zeros((1, Hp), jnp.float32).at[:, :H].set(hidden.reshape(1, H))

    grid_spec = pltpu.PrefetchScalarGridSpec(
        num_scalar_prefetch=1,
        grid=(T,),
        in_specs=[
            # on-chip embedding row gather driven by the prefetched token ids
            pl.BlockSpec((1, 1, Hp), lambda t, tok: (tok[t], 0, 0)),
            pl.BlockSpec((1, Hp), lambda t, tok: (0, 0)),             # h0 (used at t == 0)
            # weights: constant block index -> DMA'd once, VMEM-resident all steps
            pl.BlockSpec((2 * Hp, 3 * Hp), lambda t, tok: (0, 0)),
            pl.BlockSpec((2, 3 * Hp), lambda t, tok: (0, 0)),
            pl.BlockSpec((Hp, Op), lambda t, tok: (0, 0)),
            pl.BlockSpec((1, Op), lambda t, tok: (0, 0)),
        ],
        out_specs=(
            pl.BlockSpec((1, 1, Op), lambda t, tok: (t, 0, 0)),       # lane-dense logp rows
            pl.BlockSpec((1, Hp), lambda t, tok: (0, 0)),             # hidden carry (resident)
        ),
    )
    logp_pad, h_pad = pl.pallas_call(
        _fused_decoder_kernel,
        grid_spec=grid_spec,
        out_shape=(jax.ShapeDtypeStruct((T, 1, Op), jnp.float32),
                   jax.ShapeDtypeStruct((1, Hp), jnp.float32)),
        compiler_params=pltpu.CompilerParams(
            dimension_semantics=("arbitrary",)),   # sequential recurrence over time
    )(token_ids.astype(jnp.int32), emb, h0, w_gates, b_gates, w_out, b_out)

    return logp_pad.reshape(T, Op)[:, :O], h_pad[:, :H].reshape(1, 1, H)


def decoder_forward(token_id, hidden, params):
    """Mirrors DecoderRNN.forward(input, hidden): a single decode step."""
    tokens = jnp.asarray(token_id, jnp.int32).reshape((1,))
    logp, h_new = decoder_decode(tokens, hidden, params)
    return logp, h_new            # (1, O), (1, 1, H)


def reference_decode(token_ids, hidden, params):
    """Pure-JAX reference of the same (multi-step) forward pass."""
    H = params["w_ih"].shape[1]
    h0 = hidden.reshape(1, H)

    def step(h, tok):
        x = jnp.maximum(params["embedding"][tok][None, :], 0.0)
        gi = x @ params["w_ih"].T + params["b_ih"][None, :]
        gh = h @ params["w_hh"].T + params["b_hh"][None, :]
        r = jax.nn.sigmoid(gi[:, :H] + gh[:, :H])
        z = jax.nn.sigmoid(gi[:, H:2 * H] + gh[:, H:2 * H])
        n = jnp.tanh(gi[:, 2 * H:] + r * gh[:, 2 * H:])
        h_new = (1.0 - z) * n + z * h
        logits = h_new @ params["w_out"].T + params["b_out"][None, :]
        logp = jax.nn.log_softmax(logits, axis=-1)
        return h_new, logp[0]

    h_final, logps = jax.lax.scan(step, h0, token_ids)
    return logps, h_final.reshape(1, 1, H)


if __name__ == "__main__":
    hidden_size, output_size, seq_len = 32, 64, 8

    key = jax.random.PRNGKey(0)
    pkey, hkey, tkey = jax.random.split(key, 3)
    params = init_params(pkey, hidden_size, output_size)
    hidden0 = jax.random.normal(hkey, (1, 1, hidden_size), jnp.float32)
    token_ids = jax.random.randint(tkey, (seq_len,), 0, output_size, dtype=jnp.int32)

    # Fused multi-step decode (the optimized hot path: one kernel for all steps).
    logps, h_final = decoder_decode(token_ids, hidden0, params)
    logps = jax.block_until_ready(logps)
    h_final = jax.block_until_ready(h_final)

    ref_logps, ref_h = reference_decode(token_ids, hidden0, params)
    assert logps.shape == (seq_len, output_size)
    assert h_final.shape == (1, 1, hidden_size)
    assert jnp.allclose(logps, ref_logps, atol=1e-4, rtol=1e-4)
    assert jnp.allclose(h_final, ref_h, atol=1e-4, rtol=1e-4)

    # Single-step call matching DecoderRNN.forward(input, hidden) semantics.
    logp1, h1 = decoder_forward(token_ids[0], hidden0, params)
    logp1 = jax.block_until_ready(logp1)
    ref_logp1, ref_h1 = reference_decode(token_ids[:1], hidden0, params)
    assert logp1.shape == (1, output_size) and h1.shape == (1, 1, hidden_size)
    assert jnp.allclose(logp1, ref_logp1, atol=1e-4, rtol=1e-4)
    assert jnp.allclose(h1, ref_h1, atol=1e-4, rtol=1e-4)

    print("KERNEL_OK")
</pallas_src>

<mosaic_0001>
module attributes {stable_mosaic.version = 11 : i64} {
  func.func @_fused_decoder_kernel(%arg0: i32, %arg1: memref<8xi32, #tpu.memory_space<smem>>, %arg2: memref<1x1x128xf32, #tpu.memory_space<vmem>>, %arg3: memref<1x128xf32, #tpu.memory_space<vmem>>, %arg4: memref<256x384xf32, #tpu.memory_space<vmem>>, %arg5: memref<2x384xf32, #tpu.memory_space<vmem>>, %arg6: memref<128x128xf32, #tpu.memory_space<vmem>>, %arg7: memref<1x128xf32, #tpu.memory_space<vmem>>, %arg8: memref<1x1x128xf32, #tpu.memory_space<vmem>>, %arg9: memref<1x128xf32, #tpu.memory_space<vmem>>) attributes {dimension_semantics = [#tpu.dimension_semantics<arbitrary>], iteration_bounds = array<i64: 8>, scalar_prefetch = 1 : i64, scratch_operands = 0 : i64, tpu.core_type = #tpu.core_type<tc>, window_params = [{transform_indices = @transform_0, window_bounds = array<i64: 1, 1, 128>}, {pipeline_mode = #tpu.pipeline_mode<synchronous>, transform_indices = @transform_1, window_bounds = array<i64: 1, 128>}, {pipeline_mode = #tpu.pipeline_mode<synchronous>, transform_indices = @transform_2, window_bounds = array<i64: 256, 384>}, {pipeline_mode = #tpu.pipeline_mode<synchronous>, transform_indices = @transform_3, window_bounds = array<i64: 2, 384>}, {pipeline_mode = #tpu.pipeline_mode<synchronous>, transform_indices = @transform_4, window_bounds = array<i64: 128, 128>}, {pipeline_mode = #tpu.pipeline_mode<synchronous>, transform_indices = @transform_5, window_bounds = array<i64: 1, 128>}, {transform_indices = @transform_6, window_bounds = array<i64: 1, 1, 128>}, {pipeline_mode = #tpu.pipeline_mode<synchronous>, transform_indices = @transform_7, window_bounds = array<i64: 1, 128>}]} {
    %c0_i32 = arith.constant 0 : i32
    %0 = arith.cmpi eq, %arg0, %c0_i32 : i32
    %1 = arith.extui %0 : i1 to i32
    %c0_i32_0 = arith.constant 0 : i32
    %2 = arith.cmpi ne, %1, %c0_i32_0 : i32
    scf.if %2 {
      %c0_26 = arith.constant 0 : index
      %c0_27 = arith.constant 0 : index
      %62 = vector.load %arg3[%c0_26, %c0_27] : memref<1x128xf32, #tpu.memory_space<vmem>>, vector<1x128xf32>
      %c0_28 = arith.constant 0 : index
      %c0_29 = arith.constant 0 : index
      %63 = vector.load %arg9[%c0_28, %c0_29] : memref<1x128xf32, #tpu.memory_space<vmem>>, vector<1x128xf32>
      tpu.vector_store %arg9[%c0_28, %c0_29], %62 {strides = array<i32>} : memref<1x128xf32, #tpu.memory_space<vmem>>, vector<1x128xf32>,
    } else {
    }
    %c0 = arith.constant 0 : index
    %c0_1 = arith.constant 0 : index
    %c0_2 = arith.constant 0 : index
    %3 = vector.load %arg2[%c0, %c0_1, %c0_2] : memref<1x1x128xf32, #tpu.memory_space<vmem>>, vector<1x1x128xf32>
    %4 = vector.shape_cast %3 : vector<1x1x128xf32> to vector<1x128xf32>
    %cst = arith.constant 0.000000e+00 : f32
    %5 = vector.broadcast %cst : f32 to vector<1x128xf32>
    %6 = arith.maximumf %4, %5 : vector<1x128xf32>
    %c0_3 = arith.constant 0 : index
    %c0_4 = arith.constant 0 : index
    %7 = vector.load %arg9[%c0_3, %c0_4] : memref<1x128xf32, #tpu.memory_space<vmem>>, vector<1x128xf32>
    %cst_5 = arith.constant 0.000000e+00 : f32
    %8 = vector.broadcast %cst_5 : f32 to vector<1x128xf32>
    %9 = tpu.concatenate %6, %8 in 1 : vector<1x128xf32>, vector<1x128xf32> -> vector<1x256xf32>
    %10 = tpu.concatenate %8, %7 in 1 : vector<1x128xf32>, vector<1x128xf32> -> vector<1x256xf32>
    %11 = tpu.concatenate %9, %10 in 0 : vector<1x256xf32>, vector<1x256xf32> -> vector<2x256xf32>
    %c0_6 = arith.constant 0 : index
    %c0_7 = arith.constant 0 : index
    %12 = vector.load %arg4[%c0_6, %c0_7] : memref<256x384xf32, #tpu.memory_space<vmem>>, vector<256x384xf32>
    %cst_8 = arith.constant dense<0.000000e+00> : vector<2x384xf32>
    %13 = tpu.matmul %11, %12, %cst_8 {dimension_numbers = #tpu.dot_dimension_numbers<[1], [0], [0], [1], [0, 0, 1, 1], [], []>} : vector<2x256xf32>, vector<256x384xf32>, vector<2x384xf32> -> vector<2x384xf32>
    %c0_9 = arith.constant 0 : index
    %c0_10 = arith.constant 0 : index
    %14 = vector.load %arg5[%c0_9, %c0_10] : memref<2x384xf32, #tpu.memory_space<vmem>>, vector<2x384xf32>
    %15 = arith.addf %13, %14 : vector<2x384xf32>
    %16 = vector.extract_strided_slice %15 {offsets = [0, 0], sizes = [1, 384], strides = [1, 1]} : vector<2x384xf32> to vector<1x384xf32>
    %17 = vector.extract_strided_slice %15 {offsets = [1, 0], sizes = [1, 384], strides = [1, 1]} : vector<2x384xf32> to vector<1x384xf32>
    %18 = vector.extract_strided_slice %16 {offsets = [0, 0], sizes = [1, 128], strides = [1, 1]} : vector<1x384xf32> to vector<1x128xf32>
    %19 = vector.extract_strided_slice %16 {offsets = [0, 128], sizes = [1, 128], strides = [1, 1]} : vector<1x384xf32> to vector<1x128xf32>
    %20 = vector.extract_strided_slice %16 {offsets = [0, 256], sizes = [1, 128], strides = [1, 1]} : vector<1x384xf32> to vector<1x128xf32>
    %21 = vector.extract_strided_slice %17 {offsets = [0, 0], sizes = [1, 128], strides = [1, 1]} : vector<1x384xf32> to vector<1x128xf32>
    %22 = vector.extract_strided_slice %17 {offsets = [0, 128], sizes = [1, 128], strides = [1, 1]} : vector<1x384xf32> to vector<1x128xf32>
    %23 = vector.extract_strided_slice %17 {offsets = [0, 256], sizes = [1, 128], strides = [1, 1]} : vector<1x384xf32> to vector<1x128xf32>
    %24 = arith.addf %18, %21 : vector<1x128xf32>
    %25 = arith.negf %24 : vector<1x128xf32>
    %26 = math.exp %25 : vector<1x128xf32>
    %cst_11 = arith.constant 1.000000e+00 : f32
    %27 = vector.broadcast %cst_11 : f32 to vector<1x128xf32>
    %28 = arith.addf %27, %26 : vector<1x128xf32>
    %29 = arith.divf %27, %28 : vector<1x128xf32>
    %30 = arith.addf %19, %22 : vector<1x128xf32>
    %31 = arith.negf %30 : vector<1x128xf32>
    %32 = math.exp %31 : vector<1x128xf32>
    %cst_12 = arith.constant 1.000000e+00 : f32
    %33 = vector.broadcast %cst_12 : f32 to vector<1x128xf32>
    %34 = arith.addf %33, %32 : vector<1x128xf32>
    %35 = arith.divf %33, %34 : vector<1x128xf32>
    %36 = arith.mulf %29, %23 : vector<1x128xf32>
    %37 = arith.addf %20, %36 : vector<1x128xf32>
    %38 = math.tanh %37 : vector<1x128xf32>
    %cst_13 = arith.constant 1.000000e+00 : f32
    %39 = vector.broadcast %cst_13 : f32 to vector<1x128xf32>
    %40 = arith.subf %39, %35 : vector<1x128xf32>
    %41 = arith.mulf %40, %38 : vector<1x128xf32>
    %42 = arith.mulf %35, %7 : vector<1x128xf32>
    %43 = arith.addf %41, %42 : vector<1x128xf32>
    %c0_14 = arith.constant 0 : index
    %c0_15 = arith.constant 0 : index
    %44 = vector.load %arg9[%c0_14, %c0_15] : memref<1x128xf32, #tpu.memory_space<vmem>>, vector<1x128xf32>
    tpu.vector_store %arg9[%c0_14, %c0_15], %43 {strides = array<i32>} : memref<1x128xf32, #tpu.memory_space<vmem>>, vector<1x128xf32>,
    %c0_16 = arith.constant 0 : index
    %c0_17 = arith.constant 0 : index
    %45 = vector.load %arg6[%c0_16, %c0_17] : memref<128x128xf32, #tpu.memory_space<vmem>>, vector<128x128xf32>
    %cst_18 = arith.constant dense<0.000000e+00> : vector<1x128xf32>
    %46 = tpu.matmul %43, %45, %cst_18 {dimension_numbers = #tpu.dot_dimension_numbers<[1], [0], [0], [1], [0, 0, 1, 1], [], []>} : vector<1x128xf32>, vector<128x128xf32>, vector<1x128xf32> -> vector<1x128xf32>
    %c0_19 = arith.constant 0 : index
    %c0_20 = arith.constant 0 : index
    %47 = vector.load %arg7[%c0_19, %c0_20] : memref<1x128xf32, #tpu.memory_space<vmem>>, vector<1x128xf32>
    %48 = arith.addf %46, %47 : vector<1x128xf32>
    %cst_21 = arith.constant dense<0xFF800000> : vector<1xf32>
    %49 = vector.multi_reduction <maximumf>, %48, %cst_21 [1] : vector<1x128xf32> to vector<1xf32>
    %50 = vector.shape_cast %49 : vector<1xf32> to vector<1x1xf32>
    %51 = vector.broadcast %50 : vector<1x1xf32> to vector<1x128xf32>
    %52 = arith.subf %48, %51 : vector<1x128xf32>
    %53 = math.exp %52 : vector<1x128xf32>
    %cst_22 = arith.constant dense<0.000000e+00> : vector<1xf32>
    %54 = vector.multi_reduction <add>, %53, %cst_22 [1] : vector<1x128xf32> to vector<1xf32>
    %55 = vector.shape_cast %54 : vector<1xf32> to vector<1x1xf32>
    %56 = math.log %55 : vector<1x1xf32>
    %57 = vector.broadcast %56 : vector<1x1xf32> to vector<1x128xf32>
    %58 = arith.subf %52, %57 : vector<1x128xf32>
    %c0_23 = arith.constant 0 : index
    %c0_24 = arith.constant 0 : index
    %c0_25 = arith.constant 0 : index
    %59 = vector.load %arg8[%c0_23, %c0_24, %c0_25] : memref<1x1x128xf32, #tpu.memory_space<vmem>>, vector<1x1x128xf32>
    %60 = vector.shape_cast %59 : vector<1x1x128xf32> to vector<1x128xf32>
    %61 = vector.shape_cast %58 : vector<1x128xf32> to vector<1x1x128xf32>
    tpu.vector_store %arg8[%c0_23, %c0_24, %c0_25], %61 {strides = array<i32>} : memref<1x1x128xf32, #tpu.memory_space<vmem>>, vector<1x1x128xf32>,
    return
  }
  func.func @transform_0(%arg0: i32, %arg1: memref<8xi32, #tpu.memory_space<smem>>) -> (i32, i32, i32) {
    %0 = arith.index_cast %arg0 : i32 to index
    %1 = memref.load %arg1[%0] : memref<8xi32, #tpu.memory_space<smem>>
    %c0_i32 = arith.constant 0 : i32
    %c0_i32_0 = arith.constant 0 : i32
    %c0_i32_1 = arith.constant 0 : i32
    return %1, %c0_i32, %c0_i32_0 : i32, i32, i32
  }
  func.func @transform_1(%arg0: i32, %arg1: memref<8xi32, #tpu.memory_space<smem>>) -> (i32, i32) {
    %c0_i32 = arith.constant 0 : i32
    %c0_i32_0 = arith.constant 0 : i32
    %c0_i32_1 = arith.constant 0 : i32
    return %c0_i32, %c0_i32_0 : i32, i32
  }
  func.func @transform_2(%arg0: i32, %arg1: memref<8xi32, #tpu.memory_space<smem>>) -> (i32, i32) {
    %c0_i32 = arith.constant 0 : i32
    %c0_i32_0 = arith.constant 0 : i32
    %c0_i32_1 = arith.constant 0 : i32
    return %c0_i32, %c0_i32_0 : i32, i32
  }
  func.func @transform_3(%arg0: i32, %arg1: memref<8xi32, #tpu.memory_space<smem>>) -> (i32, i32) {
    %c0_i32 = arith.constant 0 : i32
    %c0_i32_0 = arith.constant 0 : i32
    %c0_i32_1 = arith.constant 0 : i32
    return %c0_i32, %c0_i32_0 : i32, i32
  }
  func.func @transform_4(%arg0: i32, %arg1: memref<8xi32, #tpu.memory_space<smem>>) -> (i32, i32) {
    %c0_i32 = arith.constant 0 : i32
    %c0_i32_0 = arith.constant 0 : i32
    %c0_i32_1 = arith.constant 0 : i32
    return %c0_i32, %c0_i32_0 : i32, i32
  }
  func.func @transform_5(%arg0: i32, %arg1: memref<8xi32, #tpu.memory_space<smem>>) -> (i32, i32) {
    %c0_i32 = arith.constant 0 : i32
    %c0_i32_0 = arith.constant 0 : i32
    %c0_i32_1 = arith.constant 0 : i32
    return %c0_i32, %c0_i32_0 : i32, i32
  }
  func.func @transform_6(%arg0: i32, %arg1: memref<8xi32, #tpu.memory_space<smem>>) -> (i32, i32, i32) {
    %c0_i32 = arith.constant 0 : i32
    %c0_i32_0 = arith.constant 0 : i32
    %c0_i32_1 = arith.constant 0 : i32
    return %arg0, %c0_i32, %c0_i32_0 : i32, i32, i32
  }
  func.func @transform_7(%arg0: i32, %arg1: memref<8xi32, #tpu.memory_space<smem>>) -> (i32, i32) {
    %c0_i32 = arith.constant 0 : i32
    %c0_i32_0 = arith.constant 0 : i32
    %c0_i32_1 = arith.constant 0 : i32
    return %c0_i32, %c0_i32_0 : i32, i32
  }
}

</mosaic_0001>

<llo_original>
// kernel: decoder_decode.1
$region0: #{decoder_decode.1}
  #allocation0 [shape = 'u32[]', space=smem, size = 0x4, offset = 0x4, fixed_abs, tag = 'smem constant byte address 0x4 - core index']
  #allocation1 [shape = 'u32[72,128]{1,0:T(1,128)}', space=vmem, size = 0x9000, scoped, tag = 'internal scratch']
  #allocation2 [shape = 's32[1]{0}', space=sflag, size = 0x4, scoped, tag = 'scoped memory for decoder_decode.1']
  #allocation3 [shape = 'u8[512]{0}', space=smem, size = 0x200, scoped, tag = 'prefetched SMEM operand 0']
  %s0 = inlined_call_operand.vmem [shape: s32[8], index: 0, kind: input, shape index: {}]
  %s1 = inlined_call_operand.vmem [shape: f32[64,1,128], index: 1, kind: input, shape index: {}]
  %s2 = inlined_call_operand.vmem [shape: f32[1,128], index: 2, kind: input, shape index: {}]
  %s3 = inlined_call_operand.vmem [shape: f32[256,384], index: 3, kind: input, shape index: {}]
  %s4 = inlined_call_operand.vmem [shape: f32[2,384], index: 4, kind: input, shape index: {}]
  %s5 = inlined_call_operand.vmem [shape: f32[128,128], index: 5, kind: input, shape index: {}]
  %s6 = inlined_call_operand.vmem [shape: f32[1,128], index: 6, kind: input, shape index: {}]
  %s7 = inlined_call_operand.hbm [shape: f32[8,1,128], index: 7, kind: output, shape index: {0}]
  %s8 = inlined_call_operand.vmem [shape: f32[1,128], index: 8, kind: output, shape index: {1}]
  %9 = xla_tuple %s7, %s8
  %s10 = sld [smem:[#allocation0]]
  $region69: #{decoder_decode.1} parent=0
    _
  %s12 = ssub.s32 1, %s10
  %s13 = scalar_select 0, %s12, %s10
  %s15 = sshll.u32 %s0, 4
  %s16 = int_to_ptr.vmem [resolvable:$true] %s15
  %18 = dma.vmem_to_smem %s16, 16, [#allocation3], [#allocation2]
  %20 = dma.done [#allocation2], 16
  %21 = sfence
  $region1: #{decoder_decode.1} parent=0
    #allocation4 [shape = 'u8[1024]{0}', space=vmem, size = 0x400, scoped, tag = 'output window, operand 0']
    #allocation5 [shape = 's32[2]{0}', space=sflag, size = 0x8, scoped, tag = 'scoped memory for decoder_decode.1']
    %22 = vsyncpa [#allocation5], 0
    %s23 = scalar_lea.sflag [#allocation5], 1
    %24 = vsyncpa %s23, 0
    loop: start=0, step=1, limit=10
    $region2: #{decoder_decode.1} parent=1 // loop_pre_header
      _
    $region3: #{decoder_decode.1} parent=1 // loop_header
      %s26 = sphi 0, %s30
      %p27 = scmp.ge.s32.totalorder %s26, 10
      %s38 = sphi 0, %s40
      %s41 = sphi 0, %s38
      %s42 = sphi 0, %s41
      %s58 = sphi 0, %s42
      %s62 = sphi 0, %s62
      %s64 = sphi 0, %s62
      %s65 = sphi 0, %s64
      %s79 = sphi 0, %s65
      %s83 = sphi 0, %s83
      %s85 = sphi 0, %s83
      %s86 = sphi 0, %s85
      %s100 = sphi 0, %s86
      %s104 = sphi 0, %s104
      %s106 = sphi 0, %s104
      %s107 = sphi 0, %s106
      %s121 = sphi 0, %s107
      %s125 = sphi 0, %s125
      %s127 = sphi 0, %s125
      %s128 = sphi 0, %s127
      %s142 = sphi 0, %s128
      %s146 = sphi 0, %s146
      %s148 = sphi 0, %s146
      %s149 = sphi 0, %s148
      %s163 = sphi 0, %s149
      %s169 = sphi 0, %s171
      %s172 = sphi 0, %s169
      %s173 = sphi 0, %s172
      %s189 = sphi 0, %s173
      %s193 = sphi 0, %s193
      %s195 = sphi 0, %s193
      %s196 = sphi 0, %s195
      %s210 = sphi 0, %s196
    $region4: #{decoder_decode.1} parent=1 // loop_header_branch
      %29 = sbr.rel (%p27) target = $region8
    $region5: #{decoder_decode.1} parent=1 // loop_body
      %s31 = ssub.s32 %s26, 1
      %s32 = ssub.s32 %s26, 2
      %s33 = sadd.s32 %s26, 1
      %s34 = sld [smem:[#allocation3 + %s26]]
      %s35 = sld [smem:[#allocation3 + %s33]]
      %s36 = ssub.s32 %s34, %s35
      %p37 = scmp.eq.s32.totalorder %s36, 0
      %s39 = sadd.s32 %s38, 1
      %s40 = scalar_select %p37, %s38, %s39
      %p43 = pneg %p37
      %p44 = scmp.eq.s32.totalorder %s26, 7
      %p45 = por %p43, %p44
      %p46 = scmp.ne.s32.totalorder %s38, %s41
      %p47 = scmp.eq.s32.totalorder %s26, 0
      %p48 = por %p46, %p47
      %p49 = scmp.ne.s32.totalorder %s38, %s41
      %p50 = scmp.eq.s32.totalorder %s31, 7
      %p51 = por %p49, %p50
      %p52 = scmp.ne.s32.totalorder %s41, %s42
      %p53 = scmp.eq.s32.totalorder %s31, 0
      %p54 = por %p52, %p53
      %p55 = scmp.ne.s32.totalorder %s41, %s42
      %p56 = scmp.eq.s32.totalorder %s32, 7
      %p57 = por %p55, %p56
      %p59 = scmp.ne.s32.totalorder %s42, %s58
      %p60 = scmp.eq.s32.totalorder %s32, 0
      %p61 = por %p59, %p60
      %s63 = sadd.s32 %s62, 1
      %p66 = scmp.eq.s32.totalorder %s26, 7
      %p67 = scmp.ne.s32.totalorder %s62, %s64
      %p68 = scmp.eq.s32.totalorder %s26, 0
      %p69 = por %p67, %p68
      %p70 = scmp.ne.s32.totalorder %s62, %s64
      %p71 = scmp.eq.s32.totalorder %s31, 7
      %p72 = por %p70, %p71
      %p73 = scmp.ne.s32.totalorder %s64, %s65
      %p74 = scmp.eq.s32.totalorder %s31, 0
      %p75 = por %p73, %p74
      %p76 = scmp.ne.s32.totalorder %s64, %s65
      %p77 = scmp.eq.s32.totalorder %s32, 7
      %p78 = por %p76, %p77
      %p80 = scmp.ne.s32.totalorder %s65, %s79
      %p81 = scmp.eq.s32.totalorder %s32, 0
      %p82 = por %p80, %p81
      %s84 = sadd.s32 %s83, 1
      %p87 = scmp.eq.s32.totalorder %s26, 7
      %p88 = scmp.ne.s32.totalorder %s83, %s85
      %p89 = scmp.eq.s32.totalorder %s26, 0
      %p90 = por %p88, %p89
      %p91 = scmp.ne.s32.totalorder %s83, %s85
      %p92 = scmp.eq.s32.totalorder %s31, 7
      %p93 = por %p91, %p92
      %p94 = scmp.ne.s32.totalorder %s85, %s86
      %p95 = scmp.eq.s32.totalorder %s31, 0
      %p96 = por %p94, %p95
      %p97 = scmp.ne.s32.totalorder %s85, %s86
      %p98 = scmp.eq.s32.totalorder %s32, 7
      %p99 = por %p97, %p98
      %p101 = scmp.ne.s32.totalorder %s86, %s100
      %p102 = scmp.eq.s32.totalorder %s32, 0
      %p103 = por %p101, %p102
      %s105 = sadd.s32 %s104, 1
      %p108 = scmp.eq.s32.totalorder %s26, 7
      %p109 = scmp.ne.s32.totalorder %s104, %s106
      %p110 = scmp.eq.s32.totalorder %s26, 0
      %p111 = por %p109, %p110
      %p112 = scmp.ne.s32.totalorder %s104, %s106
      %p113 = scmp.eq.s32.totalorder %s31, 7
      %p114 = por %p112, %p113
      %p115 = scmp.ne.s32.totalorder %s106, %s107
      %p116 = scmp.eq.s32.totalorder %s31, 0
      %p117 = por %p115, %p116
      %p118 = scmp.ne.s32.totalorder %s106, %s107
      %p119 = scmp.eq.s32.totalorder %s32, 7
      %p120 = por %p118, %p119
      %p122 = scmp.ne.s32.totalorder %s107, %s121
      %p123 = scmp.eq.s32.totalorder %s32, 0
      %p124 = por %p122, %p123
      %s126 = sadd.s32 %s125, 1
      %p129 = scmp.eq.s32.totalorder %s26, 7
      %p130 = scmp.ne.s32.totalorder %s125, %s127
      %p131 = scmp.eq.s32.totalorder %s26, 0
      %p132 = por %p130, %p131
      %p133 = scmp.ne.s32.totalorder %s125, %s127
      %p134 = scmp.eq.s32.totalorder %s31, 7
      %p135 = por %p133, %p134
      %p136 = scmp.ne.s32.totalorder %s127, %s128
      %p137 = scmp.eq.s32.totalorder %s31, 0
      %p138 = por %p136, %p137
      %p139 = scmp.ne.s32.totalorder %s127, %s128
      %p140 = scmp.eq.s32.totalorder %s32, 7
      %p141 = por %p139, %p140
      %p143 = scmp.ne.s32.totalorder %s128, %s142
      %p144 = scmp.eq.s32.totalorder %s32, 0
      %p145 = por %p143, %p144
      %s147 = sadd.s32 %s146, 1
      %p150 = scmp.eq.s32.totalorder %s26, 7
      %p151 = scmp.ne.s32.totalorder %s146, %s148
      %p152 = scmp.eq.s32.totalorder %s26, 0
      %p153 = por %p151, %p152
      %p154 = scmp.ne.s32.totalorder %s146, %s148
      %p155 = scmp.eq.s32.totalorder %s31, 7
      %p156 = por %p154, %p155
      %p157 = scmp.ne.s32.totalorder %s148, %s149
      %p158 = scmp.eq.s32.totalorder %s31, 0
      %p159 = por %p157, %p158
      %p160 = scmp.ne.s32.totalorder %s148, %s149
      %p161 = scmp.eq.s32.totalorder %s32, 7
      %p162 = por %p160, %p161
      %p164 = scmp.ne.s32.totalorder %s149, %s163
      %p165 = scmp.eq.s32.totalorder %s32, 0
      %p166 = por %p164, %p165
      %s167 = ssub.s32 %s26, %s33
      %p168 = scmp.eq.s32.totalorder %s167, 0
      %s170 = sadd.s32 %s169, 1
      %s171 = scalar_select %p168, %s169, %s170
      %p174 = pneg %p168
      %p175 = scmp.eq.s32.totalorder %s26, 7
      %p176 = por %p174, %p175
      %p177 = scmp.ne.s32.totalorder %s169, %s172
      %p178 = scmp.eq.s32.totalorder %s26, 0
      %p179 = por %p177, %p178
      %p180 = scmp.ne.s32.totalorder %s169, %s172
      %p181 = scmp.eq.s32.totalorder %s31, 7
      %p182 = por %p180, %p181
      %p183 = scmp.ne.s32.totalorder %s172, %s173
      %p184 = scmp.eq.s32.totalorder %s31, 0
      %p185 = por %p183, %p184
      %p186 = scmp.ne.s32.totalorder %s172, %s173
      %p187 = scmp.eq.s32.totalorder %s32, 7
      %p188 = por %p186, %p187
      %p190 = scmp.ne.s32.totalorder %s173, %s189
      %p191 = scmp.eq.s32.totalorder %s32, 0
      %p192 = por %p190, %p191
      %s194 = sadd.s32 %s193, 1
      %p197 = scmp.eq.s32.totalorder %s26, 7
      %p198 = scmp.ne.s32.totalorder %s193, %s195
      %p199 = scmp.eq.s32.totalorder %s26, 0
      %p200 = por %p198, %p199
      %p201 = scmp.ne.s32.totalorder %s193, %s195
      %p202 = scmp.eq.s32.totalorder %s31, 7
      %p203 = por %p201, %p202
      %p204 = scmp.ne.s32.totalorder %s195, %s196
      %p205 = scmp.eq.s32.totalorder %s31, 0
      %p206 = por %p204, %p205
      %p207 = scmp.ne.s32.totalorder %s195, %s196
      %p208 = scmp.eq.s32.totalorder %s32, 7
      %p209 = por %p207, %p208
      %p211 = scmp.ne.s32.totalorder %s196, %s210
      %p212 = scmp.eq.s32.totalorder %s32, 0
      %p213 = por %p211, %p212
      %p214 = scmp.le.s32.totalorder 1, %s26
      %p215 = scmp.lt.s32.totalorder %s26, 9
      %p216 = pnand %p214, %p215
      %p217 = pneg %p216
      // Predicated region
      $region9: #{decoder_decode.1} parent=5 // pred_check
        _
      $region10: #{decoder_decode.1} parent=5 // pred_check_branch
        %219 = sbr.rel (%p216) target = $region12
      $region11: #{decoder_decode.1} parent=5 // pred_region
        %s220 = ssub.s32 %s26, 1
        // Predicated region
        $region13: #{decoder_decode.1} parent=11 // pred_check
          %p221 = pneg %p75
        $region14: #{decoder_decode.1} parent=11 // pred_check_branch
          %223 = sbr.rel (%p221) target = $region16
        $region15: #{decoder_decode.1} parent=11 // pred_region
          _
        $region16: #{decoder_decode.1} parent=11 // pred_fallthru
          _
        // Predicated region
        $region17: #{decoder_decode.1} parent=11 // pred_check
          %p224 = pneg %p96
        $region18: #{decoder_decode.1} parent=11 // pred_check_branch
          %226 = sbr.rel (%p224) target = $region20
        $region19: #{decoder_decode.1} parent=11 // pred_region
          _
        $region20: #{decoder_decode.1} parent=11 // pred_fallthru
          _
        // Predicated region
        $region21: #{decoder_decode.1} parent=11 // pred_check
          %p227 = pneg %p117
        $region22: #{decoder_decode.1} parent=11 // pred_check_branch
          %229 = sbr.rel (%p227) target = $region24
        $region23: #{decoder_decode.1} parent=11 // pred_region
          _
        $region24: #{decoder_decode.1} parent=11 // pred_fallthru
          _
        // Predicated region
        $region25: #{decoder_decode.1} parent=11 // pred_check
          %p230 = pneg %p138
        $region26: #{decoder_decode.1} parent=11 // pred_check_branch
          %232 = sbr.rel (%p230) target = $region28
        $region27: #{decoder_decode.1} parent=11 // pred_region
          _
        $region28: #{decoder_decode.1} parent=11 // pred_fallthru
          _
        // Predicated region
        $region29: #{decoder_decode.1} parent=11 // pred_check
          %p233 = pneg %p159
        $region30: #{decoder_decode.1} parent=11 // pred_check_branch
          %235 = sbr.rel (%p233) target = $region32
        $region31: #{decoder_decode.1} parent=11 // pred_region
          _
        $region32: #{decoder_decode.1} parent=11 // pred_fallthru
          _
      $region12: #{decoder_decode.1} parent=5 // pred_fallthru
        _
      %p236 = scmp.lt.s32.totalorder %s26, 8
      // Predicated region
      $region33: #{decoder_decode.1} parent=5 // pred_check
        %p237 = pneg %p236
      $region34: #{decoder_decode.1} parent=5 // pred_check_branch
        %239 = sbr.rel (%p237) target = $region36
      $region35: #{decoder_decode.1} parent=5 // pred_region
        // Predicated region
        $region37: #{decoder_decode.1} parent=35 // pred_check
          %p240 = pneg %p48
        $region38: #{decoder_decode.1} parent=35 // pred_check_branch
          %242 = sbr.rel (%p240) target = $region40
        $region39: #{decoder_decode.1} parent=35 // pred_region
          %s243 = sld [smem:[#allocation3 + %s26]]
          %p244 = scmp.lt.s32.totalorder %s243, 63
          %s245 = scalar_select %p244, %s243, 63
          %s246 = scalar_lea.vmem %s1, %s245
          %s247 = sld [smem:[#allocation3 + %s26]]
        $region40: #{decoder_decode.1} parent=35 // pred_fallthru
          _
      $region36: #{decoder_decode.1} parent=5 // pred_fallthru
        _
      %p248 = scmp.le.s32.totalorder 1, %s26
      %p249 = scmp.lt.s32.totalorder %s26, 9
      %p250 = pnand %p248, %p249
      %p251 = pneg %p250
      // Predicated region
      $region41: #{decoder_decode.1} parent=5 // pred_check
        _
      $region42: #{decoder_decode.1} parent=5 // pred_check_branch
        %253 = sbr.rel (%p250) target = $region44
      $region43: #{decoder_decode.1} parent=5 // pred_region
        %s254 = ssub.s32 %s26, 1
        %s255 = sld [smem:[#allocation3 + %s31]]
        %p256 = scmp.lt.s32.totalorder %s255, 63
        %s257 = scalar_select %p256, %s255, 63
        %s258 = scalar_lea.vmem %s1, %s257
        %p259 = pneg %p54
        %p260 = pneg %p51
        %p261 = pneg %p75
        %p262 = pneg %p72
        %p263 = pneg %p96
        %p264 = pneg %p93
        %p265 = pneg %p117
        %p266 = pneg %p114
        %p267 = pneg %p138
        %p268 = pneg %p135
        %p269 = pneg %p159
        %p270 = pneg %p156
        %p271 = pneg %p185
        %p272 = pneg %p182
        %s273 = sand.u32 %s172, 1
        %s274 = scalar_lea.sflag [#allocation5], %s273
        %s275 = sand.u32 %s172, 1
        %s276 = scalar_lea.vmem [#allocation4], %s275
        %p277 = pneg %p206
        %p278 = pneg %p203
        %s279 = sld [smem:[#allocation3 + %s31]]
        %p280 = scmp.lt.s32.totalorder %s279, 63
        %s281 = scalar_select %p280, %s279, 63
        %s282 = scalar_lea.vmem %s1, %s281
        %s283 = sld [smem:[#allocation3 + %s31]]
        %p284 = scmp.eq.s32.totalorder %s31, 0
        // Predicated region
        $region45: #{decoder_decode.1} parent=43 // pred_check
          %p285 = pneg %p284
        $region46: #{decoder_decode.1} parent=43 // pred_check_branch
          %287 = sbr.rel (%p285) target = $region48
        $region47: #{decoder_decode.1} parent=43 // pred_region
          %v288 = vld [vmem:[%s2] sm:$0x1]
          %289 = vst [vmem:[%s8] sm:$0x1] %v288
        $region48: #{decoder_decode.1} parent=43 // pred_fallthru
          _
        %v290 = vld [vmem:[%s282] sm:$0x1]
        %v291 = vmax.f32 %v290, 0.0
        %v292 = vld [vmem:[%s8] sm:$0x1]
        %v295 = vrot.slane 0.0, 7
        %v296 = vrot.slane %v292, 7
        %vm299 = vcmask 1040384
        %v300 = vsel %vm299, %v291, %v295
        %v301 = vsel %vm299, 0.0, %v296
        %v302 = vld [vmem:[%s3] sm:$0xff]
        %v303 = vld [vmem:[%s3 + $0x8] sm:$0xff]
        %v304 = vld [vmem:[%s3 + $0x10] sm:$0xff]
        %v305 = vld [vmem:[%s3 + $0x18] sm:$0xff]
        %v306 = vld [vmem:[%s3 + $0x20] sm:$0xff]
        %v307 = vld [vmem:[%s3 + $0x28] sm:$0xff]
        %v308 = vld [vmem:[%s3 + $0x30] sm:$0xff]
        %v309 = vld [vmem:[%s3 + $0x38] sm:$0xff]
        %v310 = vld [vmem:[%s3 + $0x40] sm:$0xff]
        %v311 = vld [vmem:[%s3 + $0x48] sm:$0xff]
        %v312 = vld [vmem:[%s3 + $0x50] sm:$0xff]
        %v313 = vld [vmem:[%s3 + $0x58] sm:$0xff]
        %v314 = vld [vmem:[%s3 + $0x60] sm:$0xff]
        %v315 = vld [vmem:[%s3 + $0x68] sm:$0xff]
        %v316 = vld [vmem:[%s3 + $0x70] sm:$0xff]
        %v317 = vld [vmem:[%s3 + $0x78] sm:$0xff]
        %v318 = vld [vmem:[%s3 + $0x80] sm:$0xff]
        %v319 = vld [vmem:[%s3 + $0x88] sm:$0xff]
        %v320 = vld [vmem:[%s3 + $0x90] sm:$0xff]
        %v321 = vld [vmem:[%s3 + $0x98] sm:$0xff]
        %v322 = vld [vmem:[%s3 + $0xa0] sm:$0xff]
        %v323 = vld [vmem:[%s3 + $0xa8] sm:$0xff]
        %v324 = vld [vmem:[%s3 + $0xb0] sm:$0xff]
        %v325 = vld [vmem:[%s3 + $0xb8] sm:$0xff]
        %v326 = vld [vmem:[%s3 + $0xc0] sm:$0xff]
        %v327 = vld [vmem:[%s3 + $0xc8] sm:$0xff]
        %v328 = vld [vmem:[%s3 + $0xd0] sm:$0xff]
        %v329 = vld [vmem:[%s3 + $0xd8] sm:$0xff]
        %v330 = vld [vmem:[%s3 + $0xe0] sm:$0xff]
        %v331 = vld [vmem:[%s3 + $0xe8] sm:$0xff]
        %v332 = vld [vmem:[%s3 + $0xf0] sm:$0xff]
        %v333 = vld [vmem:[%s3 + $0xf8] sm:$0xff]
        %v334 = vld [vmem:[%s3 + $0x100] sm:$0xff]
        %v335 = vld [vmem:[%s3 + $0x108] sm:$0xff]
        %v336 = vld [vmem:[%s3 + $0x110] sm:$0xff]
        %v337 = vld [vmem:[%s3 + $0x118] sm:$0xff]
        %v338 = vld [vmem:[%s3 + $0x120] sm:$0xff]
        %v339 = vld [vmem:[%s3 + $0x128] sm:$0xff]
        %v340 = vld [vmem:[%s3 + $0x130] sm:$0xff]
        %v341 = vld [vmem:[%s3 + $0x138] sm:$0xff]
        %v342 = vld [vmem:[%s3 + $0x140] sm:$0xff]
        %v343 = vld [vmem:[%s3 + $0x148] sm:$0xff]
        %v344 = vld [vmem:[%s3 + $0x150] sm:$0xff]
        %v345 = vld [vmem:[%s3 + $0x158] sm:$0xff]
        %v346 = vld [vmem:[%s3 + $0x160] sm:$0xff]
        %v347 = vld [vmem:[%s3 + $0x168] sm:$0xff]
        %v348 = vld [vmem:[%s3 + $0x170] sm:$0xff]
        %v349 = vld [vmem:[%s3 + $0x178] sm:$0xff]
        %v350 = vld [vmem:[%s3 + $0x180] sm:$0xff]
        %v351 = vld [vmem:[%s3 + $0x188] sm:$0xff]
        %v352 = vld [vmem:[%s3 + $0x190] sm:$0xff]
        %v353 = vld [vmem:[%s3 + $0x198] sm:$0xff]
        %v354 = vld [vmem:[%s3 + $0x1a0] sm:$0xff]
        %v355 = vld [vmem:[%s3 + $0x1a8] sm:$0xff]
        %v356 = vld [vmem:[%s3 + $0x1b0] sm:$0xff]
        %v357 = vld [vmem:[%s3 + $0x1b8] sm:$0xff]
        %v358 = vld [vmem:[%s3 + $0x1c0] sm:$0xff]
        %v359 = vld [vmem:[%s3 + $0x1c8] sm:$0xff]
        %v360 = vld [vmem:[%s3 + $0x1d0] sm:$0xff]
        %v361 = vld [vmem:[%s3 + $0x1d8] sm:$0xff]
        %v362 = vld [vmem:[%s3 + $0x1e0] sm:$0xff]
        %v363 = vld [vmem:[%s3 + $0x1e8] sm:$0xff]
        %v364 = vld [vmem:[%s3 + $0x1f0] sm:$0xff]
        %v365 = vld [vmem:[%s3 + $0x1f8] sm:$0xff]
        %v366 = vld [vmem:[%s3 + $0x200] sm:$0xff]
        %v367 = vld [vmem:[%s3 + $0x208] sm:$0xff]
        %v368 = vld [vmem:[%s3 + $0x210] sm:$0xff]
        %v369 = vld [vmem:[%s3 + $0x218] sm:$0xff]
        %v370 = vld [vmem:[%s3 + $0x220] sm:$0xff]
        %v371 = vld [vmem:[%s3 + $0x228] sm:$0xff]
        %v372 = vld [vmem:[%s3 + $0x230] sm:$0xff]
        %v373 = vld [vmem:[%s3 + $0x238] sm:$0xff]
        %v374 = vld [vmem:[%s3 + $0x240] sm:$0xff]
        %v375 = vld [vmem:[%s3 + $0x248] sm:$0xff]
        %v376 = vld [vmem:[%s3 + $0x250] sm:$0xff]
        %v377 = vld [vmem:[%s3 + $0x258] sm:$0xff]
        %v378 = vld [vmem:[%s3 + $0x260] sm:$0xff]
        %v379 = vld [vmem:[%s3 + $0x268] sm:$0xff]
        %v380 = vld [vmem:[%s3 + $0x270] sm:$0xff]
        %v381 = vld [vmem:[%s3 + $0x278] sm:$0xff]
        %v382 = vld [vmem:[%s3 + $0x280] sm:$0xff]
        %v383 = vld [vmem:[%s3 + $0x288] sm:$0xff]
        %v384 = vld [vmem:[%s3 + $0x290] sm:$0xff]
        %v385 = vld [vmem:[%s3 + $0x298] sm:$0xff]
        %v386 = vld [vmem:[%s3 + $0x2a0] sm:$0xff]
        %v387 = vld [vmem:[%s3 + $0x2a8] sm:$0xff]
        %v388 = vld [vmem:[%s3 + $0x2b0] sm:$0xff]
        %v389 = vld [vmem:[%s3 + $0x2b8] sm:$0xff]
        %v390 = vld [vmem:[%s3 + $0x2c0] sm:$0xff]
        %v391 = vld [vmem:[%s3 + $0x2c8] sm:$0xff]
        %v392 = vld [vmem:[%s3 + $0x2d0] sm:$0xff]
        %v393 = vld [vmem:[%s3 + $0x2d8] sm:$0xff]
        %v394 = vld [vmem:[%s3 + $0x2e0] sm:$0xff]
        %v395 = vld [vmem:[%s3 + $0x2e8] sm:$0xff]
        %v396 = vld [vmem:[%s3 + $0x2f0] sm:$0xff]
        %v397 = vld [vmem:[%s3 + $0x2f8] sm:$0xff]
        %v398 = vld [vmem:[%s4] sm:$0x3f]
        %400 = vst [vmem:[#allocation1] ss:$4 sm:$0xff] %v398
        %v401 = vld.sshfl [vmem:[#allocation1] sm:$0xff pattern:$0x73625140]
        %v402 = vld.sshfl [vmem:[#allocation1 + $0x8] sm:$0xff pattern:$0x73625140]
        %v403 = vld.sshfl [vmem:[#allocation1 + $0x10] sm:$0xff pattern:$0x73625140]
        %407 = vmatpush.msra.mxu0 %v347
        %408 = vmatpush.msra.mxu0 %v344
        %409 = vmatpush.msra.mxu0 %v341
        %410 = vmatpush.msra.mxu0 %v338
        %411 = vmatpush.msra.mxu0 %v335
        %412 = vmatpush.msra.mxu0 %v332
        %413 = vmatpush.msra.mxu0 %v329
        %414 = vmatpush.msra.mxu0 %v326
        %415 = vmatpush.msra.mxu0 %v323
        %416 = vmatpush.msra.mxu0 %v320
        %417 = vmatpush.msra.mxu0 %v317
        %418 = vmatpush.msra.mxu0 %v314
        %419 = vmatpush.msra.mxu0 %v311
        %420 = vmatpush.msra.mxu0 %v308
        %421 = vmatpush.msra.mxu0 %v305
        %422 = vmatpush.msra.mxu0 %v302
        %423 = vmatmul.f32.gmra.mxu0 %v300
        %v424 = vpop.f32.mrf.mxu0
        %v425 = vadd.f32 %v401, %v424
        %426 = vdwg.mxu0
        %427 = vmatpush.msra.mxu0 %v395
        %428 = vmatpush.msra.mxu0 %v392
        %429 = vmatpush.msra.mxu0 %v389
        %430 = vmatpush.msra.mxu0 %v386
        %431 = vmatpush.msra.mxu0 %v383
        %432 = vmatpush.msra.mxu0 %v380
        %433 = vmatpush.msra.mxu0 %v377
        %434 = vmatpush.msra.mxu0 %v374
        %435 = vmatpush.msra.mxu0 %v371
        %436 = vmatpush.msra.mxu0 %v368
        %437 = vmatpush.msra.mxu0 %v365
        %438 = vmatpush.msra.mxu0 %v362
        %439 = vmatpush.msra.mxu0 %v359
        %440 = vmatpush.msra.mxu0 %v356
        %441 = vmatpush.msra.mxu0 %v353
        %442 = vmatpush.msra.mxu0 %v350
        %443 = vmatmul.f32.gmra.mxu0 %v301
        %v444 = vpop.f32.mrf.mxu0
        %v445 = vadd.f32 %v425, %v444
        %446 = vdwg.mxu0
        %447 = vmatpush.msra.mxu0 %v348
        %448 = vmatpush.msra.mxu0 %v345
        %449 = vmatpush.msra.mxu0 %v342
        %450 = vmatpush.msra.mxu0 %v339
        %451 = vmatpush.msra.mxu0 %v336
        %452 = vmatpush.msra.mxu0 %v333
        %453 = vmatpush.msra.mxu0 %v330
        %454 = vmatpush.msra.mxu0 %v327
        %455 = vmatpush.msra.mxu0 %v324
        %456 = vmatpush.msra.mxu0 %v321
        %457 = vmatpush.msra.mxu0 %v318
        %458 = vmatpush.msra.mxu0 %v315
        %459 = vmatpush.msra.mxu0 %v312
        %460 = vmatpush.msra.mxu0 %v309
        %461 = vmatpush.msra.mxu0 %v306
        %462 = vmatpush.msra.mxu0 %v303
        %463 = vmatmul.f32.gmra.mxu0 %v300
        %v464 = vpop.f32.mrf.mxu0
        %v465 = vadd.f32 %v402, %v464
        %466 = vdwg.mxu0
        %467 = vmatpush.msra.mxu0 %v396
        %468 = vmatpush.msra.mxu0 %v393
        %469 = vmatpush.msra.mxu0 %v390
        %470 = vmatpush.msra.mxu0 %v387
        %471 = vmatpush.msra.mxu0 %v384
        %472 = vmatpush.msra.mxu0 %v381
        %473 = vmatpush.msra.mxu0 %v378
        %474 = vmatpush.msra.mxu0 %v375
        %475 = vmatpush.msra.mxu0 %v372
        %476 = vmatpush.msra.mxu0 %v369
        %477 = vmatpush.msra.mxu0 %v366
        %478 = vmatpush.msra.mxu0 %v363
        %479 = vmatpush.msra.mxu0 %v360
        %480 = vmatpush.msra.mxu0 %v357
        %481 = vmatpush.msra.mxu0 %v354
        %482 = vmatpush.msra.mxu0 %v351
        %483 = vmatmul.f32.gmra.mxu0 %v301
        %v484 = vpop.f32.mrf.mxu0
        %v485 = vadd.f32 %v465, %v484
        %486 = vdwg.mxu0
        %487 = vmatpush.msra.mxu0 %v349
        %488 = vmatpush.msra.mxu0 %v346
        %489 = vmatpush.msra.mxu0 %v343
        %490 = vmatpush.msra.mxu0 %v340
        %491 = vmatpush.msra.mxu0 %v337
        %492 = vmatpush.msra.mxu0 %v334
        %493 = vmatpush.msra.mxu0 %v331
        %494 = vmatpush.msra.mxu0 %v328
        %495 = vmatpush.msra.mxu0 %v325
        %496 = vmatpush.msra.mxu0 %v322
        %497 = vmatpush.msra.mxu0 %v319
        %498 = vmatpush.msra.mxu0 %v316
        %499 = vmatpush.msra.mxu0 %v313
        %500 = vmatpush.msra.mxu0 %v310
        %501 = vmatpush.msra.mxu0 %v307
        %502 = vmatpush.msra.mxu0 %v304
        %503 = vmatmul.f32.gmra.mxu0 %v300
        %v504 = vpop.f32.mrf.mxu0
        %v505 = vadd.f32 %v403, %v504
        %506 = vdwg.mxu0
        %507 = vmatpush.msra.mxu0 %v397
        %508 = vmatpush.msra.mxu0 %v394
        %509 = vmatpush.msra.mxu0 %v391
        %510 = vmatpush.msra.mxu0 %v388
        %511 = vmatpush.msra.mxu0 %v385
        %512 = vmatpush.msra.mxu0 %v382
        %513 = vmatpush.msra.mxu0 %v379
        %514 = vmatpush.msra.mxu0 %v376
        %515 = vmatpush.msra.mxu0 %v373
        %516 = vmatpush.msra.mxu0 %v370
        %517 = vmatpush.msra.mxu0 %v367
        %518 = vmatpush.msra.mxu0 %v364
        %519 = vmatpush.msra.mxu0 %v361
        %520 = vmatpush.msra.mxu0 %v358
        %521 = vmatpush.msra.mxu0 %v355
        %522 = vmatpush.msra.mxu0 %v352
        %523 = vmatmul.f32.gmra.mxu0 %v301
        %v524 = vpop.f32.mrf.mxu0
        %v525 = vadd.f32 %v505, %v524
        %526 = vdwg.mxu0
        %v528 = vrot.slane %v445, 1
        %v530 = vadd.f32 %v445, %v528
        %v531 = vxor.u32 %v530, 2147483648
        %v532 = vmul.f32 %v531, 1.442695
        %v533 = vpow.pop %v532
        %v534 = vadd.f32 %v533, 1.0
        %v535 = vrcp.pop %v534
        %v536 = vmul.f32 %v534, %v535
        %v537 = vsub.f32 1.0, %v536
        %v538 = vmul.f32 %v535, %v537
        %v539 = vadd.f32 %v535, %v538
        %vm540 = vweird.f32 %v534
        %vm541 = vweird.f32 %v535
        %vm542 = vmor %vm540, %vm541
        %v543 = vsel %vm542, %v535, %v539
        %v544 = vand.u32 2147483647, %v534
        %vm545 = vcmp.eq.f32.partialorder %v544, 8.507059e+37
        %v546 = vand.u32 %v534, 2147483648
        %v547 = vor.u32 1.1754944e-38, %v546
        %v548 = vsel %vm545, %v547, %v543
        %v549 = vmul.f32 1.0, %v548
        %v551 = vrot.slane %v485, 1
        %v553 = vadd.f32 %v485, %v551
        %v554 = vxor.u32 %v553, 2147483648
        %v555 = vmul.f32 %v554, 1.442695
        %v556 = vpow.pop %v555
        %v557 = vadd.f32 %v556, 1.0
        %v558 = vrcp.pop %v557
        %v559 = vmul.f32 %v557, %v558
        %v560 = vsub.f32 1.0, %v559
        %v561 = vmul.f32 %v558, %v560
        %v562 = vadd.f32 %v558, %v561
        %vm563 = vweird.f32 %v557
        %vm564 = vweird.f32 %v558
        %vm565 = vmor %vm563, %vm564
        %v566 = vsel %vm565, %v558, %v562
        %v567 = vand.u32 2147483647, %v557
        %vm568 = vcmp.eq.f32.partialorder %v567, 8.507059e+37
        %v569 = vand.u32 %v557, 2147483648
        %v570 = vor.u32 1.1754944e-38, %v569
        %v571 = vsel %vm568, %v570, %v566
        %v572 = vmul.f32 1.0, %v571
        %v574 = vrot.slane %v525, 1
        %v576 = vmul.f32 %v549, %v574
        %v577 = vadd.f32 %v525, %v576
        %v578 = vtanh.pop %v577
        %v579 = vsub.f32 1.0, %v572
        %v580 = vmul.f32 %v579, %v578
        %v581 = vmul.f32 %v572, %v292
        %v582 = vadd.f32 %v580, %v581
        %583 = vst [vmem:[%s8] sm:$0x1] %v582
        %v584 = vld [vmem:[%s5] sm:$0xff]
        %v585 = vld [vmem:[%s5 + $0x8] sm:$0xff]
        %v586 = vld [vmem:[%s5 + $0x10] sm:$0xff]
        %v587 = vld [vmem:[%s5 + $0x18] sm:$0xff]
        %v588 = vld [vmem:[%s5 + $0x20] sm:$0xff]
        %v589 = vld [vmem:[%s5 + $0x28] sm:$0xff]
        %v590 = vld [vmem:[%s5 + $0x30] sm:$0xff]
        %v591 = vld [vmem:[%s5 + $0x38] sm:$0xff]
        %v592 = vld [vmem:[%s5 + $0x40] sm:$0xff]
        %v593 = vld [vmem:[%s5 + $0x48] sm:$0xff]
        %v594 = vld [vmem:[%s5 + $0x50] sm:$0xff]
        %v595 = vld [vmem:[%s5 + $0x58] sm:$0xff]
        %v596 = vld [vmem:[%s5 + $0x60] sm:$0xff]
        %v597 = vld [vmem:[%s5 + $0x68] sm:$0xff]
        %v598 = vld [vmem:[%s5 + $0x70] sm:$0xff]
        %v599 = vld [vmem:[%s5 + $0x78] sm:$0xff]
        %v600 = vld [vmem:[%s6] sm:$0x1]
        %601 = vmatpush.msra.mxu0 %v599
        %602 = vmatpush.msra.mxu0 %v598
        %603 = vmatpush.msra.mxu0 %v597
        %604 = vmatpush.msra.mxu0 %v596
        %605 = vmatpush.msra.mxu0 %v595
        %606 = vmatpush.msra.mxu0 %v594
        %607 = vmatpush.msra.mxu0 %v593
        %608 = vmatpush.msra.mxu0 %v592
        %609 = vmatpush.msra.mxu0 %v591
        %610 = vmatpush.msra.mxu0 %v590
        %611 = vmatpush.msra.mxu0 %v589
        %612 = vmatpush.msra.mxu0 %v588
        %613 = vmatpush.msra.mxu0 %v587
        %614 = vmatpush.msra.mxu0 %v586
        %615 = vmatpush.msra.mxu0 %v585
        %616 = vmatpush.msra.mxu0 %v584
        %617 = vmatmul.f32.gmra.mxu0 %v582
        %v618 = vpop.f32.mrf.mxu0
        %v619 = vadd.f32 %v600, %v618
        %620 = vdwg.mxu0
        %v621 = vsel %vm299, %v619, -inf
        %622 = vmax.xlane.f32.xlu0 %v621
        %v623 = vpop.xlane.xlu0 %622
        %v624 = vsub.f32 %v619, %v623
        %v625 = vmul.f32 %v624, 1.442695
        %v626 = vpow.pop %v625
        %v627 = vsel %vm299, %v626, 0.0
        %628 = vadd.xlane.f32.xlu0 %v627
        %v629 = vpop.xlane.xlu0 %628
        %v630 = vlog2.pop %v629
        %v631 = vmul.f32 %v630, 0.6931472
        %v632 = vsub.f32 %v624, %v631
        %633 = vst [vmem:[%s276] sm:$0x1] %v632
        %s634 = sand.u32 %s172, 1
        %s635 = scalar_lea.sflag [#allocation5], %s634
        %s636 = sand.u32 %s172, 1
        %s637 = scalar_lea.vmem [#allocation4], %s636
        // Predicated region
        $region49: #{decoder_decode.1} parent=43 // pred_check
          %p638 = pneg %p182
        $region50: #{decoder_decode.1} parent=43 // pred_check_branch
          %640 = sbr.rel (%p638) target = $region52
        $region51: #{decoder_decode.1} parent=43 // pred_region
          %642 = vsyncadd %s635, 0
          %s643 = scalar_lea.hbm %s7, %s31
          %s645 = sshll.u32 %s637, 4
          %s646 = int_to_ptr.vmem [resolvable:$true] %s645
          %s647 = sshll.u32 %s643, 4
          %s648 = int_to_ptr.hbm [resolvable:$true] %s647
          %650 = dma.vmem_to_hbm [thread:$0]  %s646, 16, %s648, %s635
        $region52: #{decoder_decode.1} parent=43 // pred_fallthru
          _
        // Predicated region
        $region53: #{decoder_decode.1} parent=43 // pred_check
          %p651 = pneg %p203
        $region54: #{decoder_decode.1} parent=43 // pred_check_branch
          %653 = sbr.rel (%p651) target = $region56
        $region55: #{decoder_decode.1} parent=43 // pred_region
          _
        $region56: #{decoder_decode.1} parent=43 // pred_fallthru
          _
        // Predicated region
        $region57: #{decoder_decode.1} parent=43 // pred_check
          %p654 = pneg %p203
        $region58: #{decoder_decode.1} parent=43 // pred_check_branch
          %656 = sbr.rel (%p654) target = $region60
        $region59: #{decoder_decode.1} parent=43 // pred_region
          _
        $region60: #{decoder_decode.1} parent=43 // pred_fallthru
          _
      $region44: #{decoder_decode.1} parent=5 // pred_fallthru
        _
      %p657 = scmp.le.s32.totalorder 2, %s26
      // Predicated region
      $region61: #{decoder_decode.1} parent=5 // pred_check
        %p658 = pneg %p657
      $region62: #{decoder_decode.1} parent=5 // pred_check_branch
        %660 = sbr.rel (%p658) target = $region64
      $region63: #{decoder_decode.1} parent=5 // pred_region
        %s661 = ssub.s32 %s26, 2
        // Predicated region
        $region65: #{decoder_decode.1} parent=63 // pred_check
          %p662 = pneg %p188
        $region66: #{decoder_decode.1} parent=63 // pred_check_branch
          %664 = sbr.rel (%p662) target = $region68
        $region67: #{decoder_decode.1} parent=63 // pred_region
          %s665 = sand.u32 %s173, 1
          %s666 = scalar_lea.sflag [#allocation5], %s665
          %s667 = sand.u32 %s173, 1
          %s668 = scalar_lea.vmem [#allocation4], %s667
          %670 = dma.done %s666, 16
        $region68: #{decoder_decode.1} parent=63 // pred_fallthru
          _
      $region64: #{decoder_decode.1} parent=5 // pred_fallthru
        _
    $region6: #{decoder_decode.1} parent=1 // loop_footer
      %s30 = sadd.s32 1, %s26
    $region7: #{decoder_decode.1} parent=1 // loop_footer_branch
      %25 = sbr.rel target = $region3
    $region8: #{decoder_decode.1} parent=1 // loop_exit
      _
    %671 = vsyncpa [#allocation5], 1
    %s672 = scalar_lea.sflag [#allocation5], 1
    %673 = vsyncpa %s672, 1

</llo_original>
